<compile_context>
chip_gen: v6e
topology: v6e:2x2x1
jax: 0.10.0
libtpu: 0.0.40
codegen_flags: <defaults>
</compile_context>

<pallas_src>
import jax
import jax.numpy as jnp
from jax import lax
from jax.experimental import pallas as pl
from jax.experimental.pallas import tpu as pltpu


def _fused_bmm_kernel(x1_ref, x2_ref, o_ref):
    """out[b] = x1[b]^T @ x2[b] @ x1[b]^T for the batches in this block."""
    x1 = x1_ref[...]                 # (tb, R, C)
    x2 = x2_ref[...]                 # (tb, R, C)

    # v6[b] = x1[b]^T @ x2[b]
    #   out[b,i,k] = sum_j x1[b,j,i] * x2[b,j,k]
    # Transpose folded into the contraction (LHS contracted on its sublane
    # axis -> MXU transposed-LHS feed, no XLU transpose / extra VMEM copy).
    v6 = lax.dot_general(
        x1, x2,
        dimension_numbers=(((1,), (1,)), ((0,), (0,))),
        preferred_element_type=jnp.float32)          # (tb, C, C), f32 accum

    # Keep both matmuls on the native MXU dtype path (bf16 x bf16 instead of
    # f32 x bf16 on v5e/v6e) while still accumulating in f32.
    if x1.dtype != jnp.float32:
        v6 = v6.astype(x1.dtype)

    # out[b] = v6[b] @ x1[b]^T
    #   out[b,i,k] = sum_j v6[b,i,j] * x1[b,k,j]
    # RHS contracted on its lane axis -> MXU transposed-RHS feed.
    out = lax.dot_general(
        v6, x1,
        dimension_numbers=(((2,), (2,)), ((0,), (0,))),
        preferred_element_type=jnp.float32)          # (tb, C, R), f32 accum

    o_ref[...] = out.astype(o_ref.dtype)

    # TODO(synk): for very large C (>= ~512 per block) tile the shared K=C
    # contraction (pl.loop + f32 VMEM accumulator) so the full (tb, C, C) f32
    # intermediate v6 is never materialized at once.
    # TODO(synk): for C < 128 a lane-dense (tb, C*R) output slab would replace
    # the masked vst.msk stores, but the required in-kernel minor-dim reshape
    # does not lower reliably in Mosaic, so it is intentionally not done here.


def model_forward(x1, x2, *, batch_tile=None, vmem_budget_bytes=24 * 1024 * 1024):
    """Pallas implementation of Model.forward.

    x1, x2: (B, R, C)  ->  out: (B, C, R)  with out[b] = x1[b]^T @ x2[b] @ x1[b]^T.
    """
    assert x1.ndim == 3 and x1.shape == x2.shape
    B, R, C = x1.shape

    in_item = jnp.dtype(x1.dtype).itemsize
    out_item = in_item
    # Live VMEM per batch element in one grid step:
    #   2 inputs x double-buffer + output x double-buffer + f32 intermediates.
    per_batch = (4 * in_item * R * C            # x1, x2 double-buffered
                 + 2 * out_item * C * R         # output double-buffered
                 + 4 * C * C + 4 * C * R)       # f32 v6 + f32 pre-cast result
    if batch_tile is None:
        batch_tile = max(1, vmem_budget_bytes // max(per_batch, 1))
    tb = int(max(1, min(batch_tile, B)))

    grid = (pl.cdiv(B, tb),)
    # Trailing dims of every block equal the full array dims -> (8,128) rule
    # satisfied via the full-dims exception for any R, C.
    in_spec = pl.BlockSpec((tb, R, C), lambda i: (i, 0, 0))
    out_spec = pl.BlockSpec((tb, C, R), lambda i: (i, 0, 0))

    est_bytes = tb * per_batch
    vmem_limit = int(min(56 * 1024 * 1024,
                         max(32 * 1024 * 1024, 2 * est_bytes)))

    return pl.pallas_call(
        _fused_bmm_kernel,
        out_shape=jax.ShapeDtypeStruct((B, C, R), x1.dtype),
        grid=grid,
        in_specs=[in_spec, in_spec],
        out_specs=out_spec,
        compiler_params=pltpu.CompilerParams(
            dimension_semantics=("parallel",),   # batch axis -> megacore shard
            vmem_limit_bytes=vmem_limit),
    )(x1, x2)


def _reference(x1, x2):
    # Pure-JAX reference mirroring the PyTorch forward exactly.
    v4 = jnp.transpose(x1, (0, 2, 1))
    v6 = jnp.einsum("bij,bjk->bik", v4, x2)
    return jnp.einsum("bij,bjk->bik", v6, v4)


if __name__ == "__main__":
    key = jax.random.PRNGKey(0)
    k1, k2, k3, k4 = jax.random.split(key, 4)

    # Small shapes consistent with the module's (batch, n, n) inputs.
    B, N = 2, 16
    x1 = jax.random.normal(k1, (B, N, N), dtype=jnp.float32)
    x2 = jax.random.normal(k2, (B, N, N), dtype=jnp.float32)

    out = jax.block_until_ready(model_forward(x1, x2))
    ref = _reference(x1, x2)
    assert out.shape == ref.shape
    assert out.dtype == x1.dtype
    assert jnp.allclose(out, ref, atol=1e-4, rtol=1e-4)

    # Also exercise the batch-chunked, pipelined grid path (grid > 1).
    B2, N2 = 4, 16
    y1 = jax.random.normal(k3, (B2, N2, N2), dtype=jnp.float32)
    y2 = jax.random.normal(k4, (B2, N2, N2), dtype=jnp.float32)
    out2 = jax.block_until_ready(model_forward(y1, y2, batch_tile=2))
    ref2 = _reference(y1, y2)
    assert jnp.allclose(out2, ref2, atol=1e-4, rtol=1e-4)

    print("KERNEL_OK")
</pallas_src>

<mosaic_0001>
module attributes {stable_mosaic.version = 11 : i64} {
  func.func @_fused_bmm_kernel(%arg0: i32, %arg1: memref<2x16x16xf32, #tpu.memory_space<vmem>>, %arg2: memref<2x16x16xf32, #tpu.memory_space<vmem>>, %arg3: memref<2x16x16xf32, #tpu.memory_space<vmem>>) attributes {dimension_semantics = [#tpu.dimension_semantics<parallel>], iteration_bounds = array<i64: 1>, scalar_prefetch = 0 : i64, scratch_operands = 0 : i64, tpu.core_type = #tpu.core_type<tc>, window_params = [{transform_indices = @transform_0, window_bounds = array<i64: 2, 16, 16>}, {transform_indices = @transform_1, window_bounds = array<i64: 2, 16, 16>}, {transform_indices = @transform_2, window_bounds = array<i64: 2, 16, 16>}]} {
    %c0 = arith.constant 0 : index
    %c0_0 = arith.constant 0 : index
    %c0_1 = arith.constant 0 : index
    %0 = vector.load %arg1[%c0, %c0_0, %c0_1] : memref<2x16x16xf32, #tpu.memory_space<vmem>>, vector<2x16x16xf32>
    %c0_2 = arith.constant 0 : index
    %c0_3 = arith.constant 0 : index
    %c0_4 = arith.constant 0 : index
    %1 = vector.load %arg2[%c0_2, %c0_3, %c0_4] : memref<2x16x16xf32, #tpu.memory_space<vmem>>, vector<2x16x16xf32>
    %cst = arith.constant dense<0.000000e+00> : vector<2x16x16xf32>
    %2 = tpu.matmul %0, %1, %cst {dimension_numbers = #tpu.dot_dimension_numbers<[1], [1], [2], [2], [0, 0, 0, 2, 1, 2], [0], [0]>} : vector<2x16x16xf32>, vector<2x16x16xf32>, vector<2x16x16xf32> -> vector<2x16x16xf32>
    %cst_5 = arith.constant dense<0.000000e+00> : vector<2x16x16xf32>
    %3 = tpu.matmul %2, %0, %cst_5 {dimension_numbers = #tpu.dot_dimension_numbers<[2], [2], [1], [1], [0, 0, 0, 1, 1, 1], [0], [0]>} : vector<2x16x16xf32>, vector<2x16x16xf32>, vector<2x16x16xf32> -> vector<2x16x16xf32>
    %c0_6 = arith.constant 0 : index
    %c0_7 = arith.constant 0 : index
    %c0_8 = arith.constant 0 : index
    %4 = vector.load %arg3[%c0_6, %c0_7, %c0_8] : memref<2x16x16xf32, #tpu.memory_space<vmem>>, vector<2x16x16xf32>
    tpu.vector_store %arg3[%c0_6, %c0_7, %c0_8], %3 {strides = array<i32>} : memref<2x16x16xf32, #tpu.memory_space<vmem>>, vector<2x16x16xf32>,
    return
  }
  func.func @transform_0(%arg0: i32) -> (i32, i32, i32) {
    %c0_i32 = arith.constant 0 : i32
    %c0_i32_0 = arith.constant 0 : i32
    %c0_i32_1 = arith.constant 0 : i32
    return %arg0, %c0_i32, %c0_i32_0 : i32, i32, i32
  }
  func.func @transform_1(%arg0: i32) -> (i32, i32, i32) {
    %c0_i32 = arith.constant 0 : i32
    %c0_i32_0 = arith.constant 0 : i32
    %c0_i32_1 = arith.constant 0 : i32
    return %arg0, %c0_i32, %c0_i32_0 : i32, i32, i32
  }
  func.func @transform_2(%arg0: i32) -> (i32, i32, i32) {
    %c0_i32 = arith.constant 0 : i32
    %c0_i32_0 = arith.constant 0 : i32
    %c0_i32_1 = arith.constant 0 : i32
    return %arg0, %c0_i32, %c0_i32_0 : i32, i32, i32
  }
}

</mosaic_0001>

<llo_original>
// kernel: tpu_custom_call.1
$region0: #{tpu_custom_call.1}
  #allocation0 [shape = 'u32[]', space=smem, size = 0x4, offset = 0x4, fixed_abs, tag = 'smem constant byte address 0x4 - core index']
  #allocation1 [shape = 'u32[144,128]{1,0:T(1,128)}', space=vmem, size = 0x12000, scoped, tag = 'internal scratch']
  %s0 = inlined_call_operand.hbm [shape: f32[2,16,16], index: 0, kind: input, shape index: {}]
  %s1 = inlined_call_operand.hbm [shape: f32[2,16,16], index: 1, kind: input, shape index: {}]
  %s2 = inlined_call_operand.hbm [shape: f32[2,16,16], index: 2, kind: output, shape index: {}]
  %s3 = sld [smem:[#allocation0]]
  $region26: #{tpu_custom_call.1} parent=0
    _
  %s5 = ssub.s32 1, %s3
  %s6 = scalar_select 0, %s5, %s3
  $region1: #{tpu_custom_call.1} parent=0
    #allocation2 [shape = 'u8[16384]{0}', space=vmem, size = 0x4000, scoped, tag = 'input window, operand 0, single buffered']
    #allocation3 [shape = 's32[1]{0}', space=sflag, size = 0x4, scoped, tag = 'scoped memory for tpu_custom_call.1']
    #allocation4 [shape = 's32[1]{0}', space=sflag, size = 0x4, scoped, tag = 'scoped memory for tpu_custom_call.1']
    #allocation5 [shape = 'u8[16384]{0}', space=vmem, size = 0x4000, scoped, tag = 'input window, operand 1, single buffered']
    #allocation6 [shape = 's32[1]{0}', space=sflag, size = 0x4, scoped, tag = 'scoped memory for tpu_custom_call.1']
    #allocation7 [shape = 'u8[16384]{0}', space=vmem, size = 0x4000, scoped, tag = 'output window, operand 0, single buffered']
    %7 = vsyncpa [#allocation3], 0
    %8 = vsyncpa [#allocation6], 0
    %9 = vsyncpa [#allocation4], 0
    // Predicated region
    $region2: #{tpu_custom_call.1} parent=1 // pred_check
      _
    $region3: #{tpu_custom_call.1} parent=1 // pred_check_branch
      %11 = sbr.rel (0) target = $region5
    $region4: #{tpu_custom_call.1} parent=1 // pred_region
      %s13 = ssub.s32 512, 512
      %14 = vsyncadd [#allocation3], %s13
      %s15 = sshll.u32 [#allocation2], 4
      %s16 = int_to_ptr.vmem [resolvable:$true] %s15
      %21 = dma.hbm_to_vmem [thread:$0]  %s0, 512, %s16, [#allocation3], 128, 128, 8
    $region5: #{tpu_custom_call.1} parent=1 // pred_fallthru
      _
    // Predicated region
    $region6: #{tpu_custom_call.1} parent=1 // pred_check
      _
    $region7: #{tpu_custom_call.1} parent=1 // pred_check_branch
      %23 = sbr.rel (0) target = $region9
    $region8: #{tpu_custom_call.1} parent=1 // pred_region
      %s25 = ssub.s32 512, 512
      %26 = vsyncadd [#allocation6], %s25
      %s27 = sshll.u32 [#allocation5], 4
      %s28 = int_to_ptr.vmem [resolvable:$true] %s27
      %33 = dma.hbm_to_vmem [thread:$0]  %s1, 512, %s28, [#allocation6], 128, 128, 8
    $region9: #{tpu_custom_call.1} parent=1 // pred_fallthru
      _
    // Predicated region
    $region10: #{tpu_custom_call.1} parent=1 // pred_check
      _
    $region11: #{tpu_custom_call.1} parent=1 // pred_check_branch
      %35 = sbr.rel (0) target = $region13
    $region12: #{tpu_custom_call.1} parent=1 // pred_region
      %36 = dma.done [#allocation3], 512
    $region13: #{tpu_custom_call.1} parent=1 // pred_fallthru
      _
    // Predicated region
    $region14: #{tpu_custom_call.1} parent=1 // pred_check
      _
    $region15: #{tpu_custom_call.1} parent=1 // pred_check_branch
      %38 = sbr.rel (0) target = $region17
    $region16: #{tpu_custom_call.1} parent=1 // pred_region
      %39 = dma.done [#allocation6], 512
    $region17: #{tpu_custom_call.1} parent=1 // pred_fallthru
      _
    %v40 = vld [vmem:[#allocation2] sm:$0xff]
    %v41 = vld [vmem:[#allocation2 + $0x8] sm:$0xff]
    %v42 = vld [vmem:[#allocation2 + $0x10] sm:$0xff]
    %v43 = vld [vmem:[#allocation2 + $0x18] sm:$0xff]
    %v44 = vld [vmem:[#allocation5] sm:$0xff]
    %v45 = vld [vmem:[#allocation5 + $0x8] sm:$0xff]
    %v46 = vld [vmem:[#allocation5 + $0x10] sm:$0xff]
    %v47 = vld [vmem:[#allocation5 + $0x18] sm:$0xff]
    %48 = vxpose.xlu0.b32.start [1/16] %v40, 128
    %49 = vxpose.xlu0.b32.cont [2/16] %v41, 128
    %50 = vxpose.xlu0.b32.cont [3/16] 0.0, 128
    %51 = vxpose.xlu0.b32.cont [4/16] 0.0, 128
    %52 = vxpose.xlu0.b32.cont [5/16] 0.0, 128
    %53 = vxpose.xlu0.b32.cont [6/16] 0.0, 128
    %54 = vxpose.xlu0.b32.cont [7/16] 0.0, 128
    %55 = vxpose.xlu0.b32.cont [8/16] 0.0, 128
    %56 = vxpose.xlu0.b32.cont [9/16] 0.0, 128
    %57 = vxpose.xlu0.b32.cont [10/16] 0.0, 128
    %58 = vxpose.xlu0.b32.cont [11/16] 0.0, 128
    %59 = vxpose.xlu0.b32.cont [12/16] 0.0, 128
    %60 = vxpose.xlu0.b32.cont [13/16] 0.0, 128
    %61 = vxpose.xlu0.b32.cont [14/16] 0.0, 128
    %62 = vxpose.xlu0.b32.cont [15/16] 0.0, 128
    %63 = vxpose.xlu0.b32.end [16/16] 0.0, 128
    %v64 = vpop.trf.xlu0
    %v65 = vpop.trf.xlu0
    %v66 = vpop.trf.xlu0
    %v67 = vpop.trf.xlu0
    %v68 = vpop.trf.xlu0
    %v69 = vpop.trf.xlu0
    %v70 = vpop.trf.xlu0
    %v71 = vpop.trf.xlu0
    %v72 = vpop.trf.xlu0
    %v73 = vpop.trf.xlu0
    %v74 = vpop.trf.xlu0
    %v75 = vpop.trf.xlu0
    %v76 = vpop.trf.xlu0
    %v77 = vpop.trf.xlu0
    %v78 = vpop.trf.xlu0
    %v79 = vpop.trf.xlu0
    %vm80 = vcmask 130048
    %v82 = vsel %vm80, %v64, 0
    %v85 = vsel %vm80, %v65, 0
    %87 = vmatprep.subr.mxu0 0.0
    %88 = vmatpush1.msra.mxu0 0.0
    %89 = vmatprep.subr.mxu0 0.0
    %90 = vmatpush1.msra.mxu0 0.0
    %91 = vmatprep.subr.mxu0 0.0
    %92 = vmatpush1.msra.mxu0 0.0
    %93 = vmatprep.subr.mxu0 0.0
    %94 = vmatpush1.msra.mxu0 0.0
    %95 = vmatprep.subr.mxu0 0.0
    %96 = vmatpush1.msra.mxu0 0.0
    %97 = vmatprep.subr.mxu0 0.0
    %98 = vmatpush1.msra.mxu0 0.0
    %99 = vmatprep.subr.mxu0 0.0
    %100 = vmatpush1.msra.mxu0 0.0
    %101 = vmatprep.subr.mxu0 0.0
    %102 = vmatpush1.msra.mxu0 0.0
    %103 = vmatprep.subr.mxu0 0.0
    %104 = vmatpush1.msra.mxu0 0.0
    %105 = vmatprep.subr.mxu0 0.0
    %106 = vmatpush1.msra.mxu0 0.0
    %107 = vmatprep.subr.mxu0 0.0
    %108 = vmatpush1.msra.mxu0 0.0
    %109 = vmatprep.subr.mxu0 0.0
    %110 = vmatpush1.msra.mxu0 0.0
    %111 = vmatprep.subr.mxu0 0.0
    %112 = vmatpush1.msra.mxu0 0.0
    %113 = vmatprep.subr.mxu0 0.0
    %114 = vmatpush1.msra.mxu0 0.0
    %115 = vmatprep.subr.mxu0 0.0
    %116 = vmatpush1.msra.mxu0 %v45
    %117 = vmatprep.subr.mxu0 0.0
    %118 = vmatpush1.msra.mxu0 %v44
    %119 = vmatprep.subr.mxu0 0.0
    %120 = vmatpush2.msra.mxu0 0.0
    %121 = vmatprep.subr.mxu0 0.0
    %122 = vmatpush2.msra.mxu0 0.0
    %123 = vmatprep.subr.mxu0 0.0
    %124 = vmatpush2.msra.mxu0 0.0
    %125 = vmatprep.subr.mxu0 0.0
    %126 = vmatpush2.msra.mxu0 0.0
    %127 = vmatprep.subr.mxu0 0.0
    %128 = vmatpush2.msra.mxu0 0.0
    %129 = vmatprep.subr.mxu0 0.0
    %130 = vmatpush2.msra.mxu0 0.0
    %131 = vmatprep.subr.mxu0 0.0
    %132 = vmatpush2.msra.mxu0 0.0
    %133 = vmatprep.subr.mxu0 0.0
    %134 = vmatpush2.msra.mxu0 0.0
    %135 = vmatprep.subr.mxu0 0.0
    %136 = vmatpush2.msra.mxu0 0.0
    %137 = vmatprep.subr.mxu0 0.0
    %138 = vmatpush2.msra.mxu0 0.0
    %139 = vmatprep.subr.mxu0 0.0
    %140 = vmatpush2.msra.mxu0 0.0
    %141 = vmatprep.subr.mxu0 0.0
    %142 = vmatpush2.msra.mxu0 0.0
    %143 = vmatprep.subr.mxu0 0.0
    %144 = vmatpush2.msra.mxu0 0.0
    %145 = vmatprep.subr.mxu0 0.0
    %146 = vmatpush2.msra.mxu0 0.0
    %147 = vmatprep.subr.mxu0 0.0
    %148 = vmatpush2.msra.mxu0 0.0
    %149 = vmatprep.subr.mxu0 0.0
    %150 = vmatpush2.msra.mxu0 0.0
    %151 = vmatprep.mubr.f32.mxu0 0.0
    %152 = vmatmul.mubr.f32.gmra.mxu0 %v82
    %v153 = vpop.f32.mrf.mxu0
    %v154 = vadd.f32 0.0, %v153
    %v155 = vpop.f32.mrf.mxu0
    %156 = vmatprep.mubr.f32.mxu0 0.0
    %157 = vmatmul.mubr.f32.gmra.mxu0 %v85
    %v158 = vpop.f32.mrf.mxu0
    %v159 = vadd.f32 0.0, %v158
    %v160 = vpop.f32.mrf.mxu0
    %161 = vdwg.mxu0
    %162 = vxpose.xlu0.b32.start [1/16] %v42, 128
    %163 = vxpose.xlu0.b32.cont [2/16] %v43, 128
    %164 = vxpose.xlu0.b32.cont [3/16] 0.0, 128
    %165 = vxpose.xlu0.b32.cont [4/16] 0.0, 128
    %166 = vxpose.xlu0.b32.cont [5/16] 0.0, 128
    %167 = vxpose.xlu0.b32.cont [6/16] 0.0, 128
    %168 = vxpose.xlu0.b32.cont [7/16] 0.0, 128
    %169 = vxpose.xlu0.b32.cont [8/16] 0.0, 128
    %170 = vxpose.xlu0.b32.cont [9/16] 0.0, 128
    %171 = vxpose.xlu0.b32.cont [10/16] 0.0, 128
    %172 = vxpose.xlu0.b32.cont [11/16] 0.0, 128
    %173 = vxpose.xlu0.b32.cont [12/16] 0.0, 128
    %174 = vxpose.xlu0.b32.cont [13/16] 0.0, 128
    %175 = vxpose.xlu0.b32.cont [14/16] 0.0, 128
    %176 = vxpose.xlu0.b32.cont [15/16] 0.0, 128
    %177 = vxpose.xlu0.b32.end [16/16] 0.0, 128
    %v178 = vpop.trf.xlu0
    %v179 = vpop.trf.xlu0
    %v180 = vpop.trf.xlu0
    %v181 = vpop.trf.xlu0
    %v182 = vpop.trf.xlu0
    %v183 = vpop.trf.xlu0
    %v184 = vpop.trf.xlu0
    %v185 = vpop.trf.xlu0
    %v186 = vpop.trf.xlu0
    %v187 = vpop.trf.xlu0
    %v188 = vpop.trf.xlu0
    %v189 = vpop.trf.xlu0
    %v190 = vpop.trf.xlu0
    %v191 = vpop.trf.xlu0
    %v192 = vpop.trf.xlu0
    %v193 = vpop.trf.xlu0
    %v195 = vsel %vm80, %v178, 0
    %v198 = vsel %vm80, %v179, 0
    %200 = vmatprep.subr.mxu0 0.0
    %201 = vmatpush1.msra.mxu0 0.0
    %202 = vmatprep.subr.mxu0 0.0
    %203 = vmatpush1.msra.mxu0 0.0
    %204 = vmatprep.subr.mxu0 0.0
    %205 = vmatpush1.msra.mxu0 0.0
    %206 = vmatprep.subr.mxu0 0.0
    %207 = vmatpush1.msra.mxu0 0.0
    %208 = vmatprep.subr.mxu0 0.0
    %209 = vmatpush1.msra.mxu0 0.0
    %210 = vmatprep.subr.mxu0 0.0
    %211 = vmatpush1.msra.mxu0 0.0
    %212 = vmatprep.subr.mxu0 0.0
    %213 = vmatpush1.msra.mxu0 0.0
    %214 = vmatprep.subr.mxu0 0.0
    %215 = vmatpush1.msra.mxu0 0.0
    %216 = vmatprep.subr.mxu0 0.0
    %217 = vmatpush1.msra.mxu0 0.0
    %218 = vmatprep.subr.mxu0 0.0
    %219 = vmatpush1.msra.mxu0 0.0
    %220 = vmatprep.subr.mxu0 0.0
    %221 = vmatpush1.msra.mxu0 0.0
    %222 = vmatprep.subr.mxu0 0.0
    %223 = vmatpush1.msra.mxu0 0.0
    %224 = vmatprep.subr.mxu0 0.0
    %225 = vmatpush1.msra.mxu0 0.0
    %226 = vmatprep.subr.mxu0 0.0
    %227 = vmatpush1.msra.mxu0 0.0
    %228 = vmatprep.subr.mxu0 0.0
    %229 = vmatpush1.msra.mxu0 %v47
    %230 = vmatprep.subr.mxu0 0.0
    %231 = vmatpush1.msra.mxu0 %v46
    %232 = vmatprep.subr.mxu0 0.0
    %233 = vmatpush2.msra.mxu0 0.0
    %234 = vmatprep.subr.mxu0 0.0
    %235 = vmatpush2.msra.mxu0 0.0
    %236 = vmatprep.subr.mxu0 0.0
    %237 = vmatpush2.msra.mxu0 0.0
    %238 = vmatprep.subr.mxu0 0.0
    %239 = vmatpush2.msra.mxu0 0.0
    %240 = vmatprep.subr.mxu0 0.0
    %241 = vmatpush2.msra.mxu0 0.0
    %242 = vmatprep.subr.mxu0 0.0
    %243 = vmatpush2.msra.mxu0 0.0
    %244 = vmatprep.subr.mxu0 0.0
    %245 = vmatpush2.msra.mxu0 0.0
    %246 = vmatprep.subr.mxu0 0.0
    %247 = vmatpush2.msra.mxu0 0.0
    %248 = vmatprep.subr.mxu0 0.0
    %249 = vmatpush2.msra.mxu0 0.0
    %250 = vmatprep.subr.mxu0 0.0
    %251 = vmatpush2.msra.mxu0 0.0
    %252 = vmatprep.subr.mxu0 0.0
    %253 = vmatpush2.msra.mxu0 0.0
    %254 = vmatprep.subr.mxu0 0.0
    %255 = vmatpush2.msra.mxu0 0.0
    %256 = vmatprep.subr.mxu0 0.0
    %257 = vmatpush2.msra.mxu0 0.0
    %258 = vmatprep.subr.mxu0 0.0
    %259 = vmatpush2.msra.mxu0 0.0
    %260 = vmatprep.subr.mxu0 0.0
    %261 = vmatpush2.msra.mxu0 0.0
    %262 = vmatprep.subr.mxu0 0.0
    %263 = vmatpush2.msra.mxu0 0.0
    %264 = vmatprep.mubr.f32.mxu0 0.0
    %265 = vmatmul.mubr.f32.gmra.mxu0 %v195
    %v266 = vpop.f32.mrf.mxu0
    %v267 = vadd.f32 0.0, %v266
    %v268 = vpop.f32.mrf.mxu0
    %269 = vmatprep.mubr.f32.mxu0 0.0
    %270 = vmatmul.mubr.f32.gmra.mxu0 %v198
    %v271 = vpop.f32.mrf.mxu0
    %v272 = vadd.f32 0.0, %v271
    %v273 = vpop.f32.mrf.mxu0
    %274 = vdwg.mxu0
    %v276 = vsel %vm80, %v154, 0
    %v279 = vsel %vm80, %v159, 0
    %v282 = vsel %vm80, %v40, 0
    %v285 = vsel %vm80, %v41, 0
    %287 = vmatprep.subr.mxu0 0.0
    %288 = vmatpush1.xpose.msra.mxu0 0.0
    %289 = vmatprep.subr.mxu0 0.0
    %290 = vmatpush1.xpose.msra.mxu0 0.0
    %291 = vmatprep.subr.mxu0 0.0
    %292 = vmatpush1.xpose.msra.mxu0 0.0
    %293 = vmatprep.subr.mxu0 0.0
    %294 = vmatpush1.xpose.msra.mxu0 0.0
    %295 = vmatprep.subr.mxu0 0.0
    %296 = vmatpush1.xpose.msra.mxu0 0.0
    %297 = vmatprep.subr.mxu0 0.0
    %298 = vmatpush1.xpose.msra.mxu0 0.0
    %299 = vmatprep.subr.mxu0 0.0
    %300 = vmatpush1.xpose.msra.mxu0 0.0
    %301 = vmatprep.subr.mxu0 0.0
    %302 = vmatpush1.xpose.msra.mxu0 0.0
    %303 = vmatprep.subr.mxu0 0.0
    %304 = vmatpush1.xpose.msra.mxu0 0.0
    %305 = vmatprep.subr.mxu0 0.0
    %306 = vmatpush1.xpose.msra.mxu0 0.0
    %307 = vmatprep.subr.mxu0 0.0
    %308 = vmatpush1.xpose.msra.mxu0 0.0
    %309 = vmatprep.subr.mxu0 0.0
    %310 = vmatpush1.xpose.msra.mxu0 0.0
    %311 = vmatprep.subr.mxu0 0.0
    %312 = vmatpush1.xpose.msra.mxu0 0.0
    %313 = vmatprep.subr.mxu0 0.0
    %314 = vmatpush1.xpose.msra.mxu0 0.0
    %315 = vmatprep.subr.mxu0 0.0
    %316 = vmatpush1.xpose.msra.mxu0 %v285
    %317 = vmatprep.subr.mxu0 0.0
    %318 = vmatpush1.xpose.msra.mxu0 %v282
    %319 = vmatprep.subr.mxu0 0.0
    %320 = vmatpush2.xpose.msra.mxu0 0.0
    %321 = vmatprep.subr.mxu0 0.0
    %322 = vmatpush2.xpose.msra.mxu0 0.0
    %323 = vmatprep.subr.mxu0 0.0
    %324 = vmatpush2.xpose.msra.mxu0 0.0
    %325 = vmatprep.subr.mxu0 0.0
    %326 = vmatpush2.xpose.msra.mxu0 0.0
    %327 = vmatprep.subr.mxu0 0.0
    %328 = vmatpush2.xpose.msra.mxu0 0.0
    %329 = vmatprep.subr.mxu0 0.0
    %330 = vmatpush2.xpose.msra.mxu0 0.0
    %331 = vmatprep.subr.mxu0 0.0
    %332 = vmatpush2.xpose.msra.mxu0 0.0
    %333 = vmatprep.subr.mxu0 0.0
    %334 = vmatpush2.xpose.msra.mxu0 0.0
    %335 = vmatprep.subr.mxu0 0.0
    %336 = vmatpush2.xpose.msra.mxu0 0.0
    %337 = vmatprep.subr.mxu0 0.0
    %338 = vmatpush2.xpose.msra.mxu0 0.0
    %339 = vmatprep.subr.mxu0 0.0
    %340 = vmatpush2.xpose.msra.mxu0 0.0
    %341 = vmatprep.subr.mxu0 0.0
    %342 = vmatpush2.xpose.msra.mxu0 0.0
    %343 = vmatprep.subr.mxu0 0.0
    %344 = vmatpush2.xpose.msra.mxu0 0.0
    %345 = vmatprep.subr.mxu0 0.0
    %346 = vmatpush2.xpose.msra.mxu0 0.0
    %347 = vmatprep.subr.mxu0 0.0
    %348 = vmatpush2.xpose.msra.mxu0 0.0
    %349 = vmatprep.subr.mxu0 0.0
    %350 = vmatpush2.xpose.msra.mxu0 0.0
    %351 = vmatprep.mubr.f32.mxu0 0.0
    %352 = vmatmul.mubr.f32.gmra.mxu0 %v276
    %v353 = vpop.f32.mrf.mxu0
    %v354 = vadd.f32 0.0, %v353
    %v355 = vpop.f32.mrf.mxu0
    %356 = vmatprep.mubr.f32.mxu0 0.0
    %357 = vmatmul.mubr.f32.gmra.mxu0 %v279
    %v358 = vpop.f32.mrf.mxu0
    %v359 = vadd.f32 0.0, %v358
    %v360 = vpop.f32.mrf.mxu0
    %361 = vdwg.mxu0
    %v363 = vsel %vm80, %v267, 0
    %v366 = vsel %vm80, %v272, 0
    %v369 = vsel %vm80, %v42, 0
    %v372 = vsel %vm80, %v43, 0
    %374 = vmatprep.subr.mxu0 0.0
    %375 = vmatpush1.xpose.msra.mxu0 0.0
    %376 = vmatprep.subr.mxu0 0.0
    %377 = vmatpush1.xpose.msra.mxu0 0.0
    %378 = vmatprep.subr.mxu0 0.0
    %379 = vmatpush1.xpose.msra.mxu0 0.0
    %380 = vmatprep.subr.mxu0 0.0
    %381 = vmatpush1.xpose.msra.mxu0 0.0
    %382 = vmatprep.subr.mxu0 0.0
    %383 = vmatpush1.xpose.msra.mxu0 0.0
    %384 = vmatprep.subr.mxu0 0.0
    %385 = vmatpush1.xpose.msra.mxu0 0.0
    %386 = vmatprep.subr.mxu0 0.0
    %387 = vmatpush1.xpose.msra.mxu0 0.0
    %388 = vmatprep.subr.mxu0 0.0
    %389 = vmatpush1.xpose.msra.mxu0 0.0
    %390 = vmatprep.subr.mxu0 0.0
    %391 = vmatpush1.xpose.msra.mxu0 0.0
    %392 = vmatprep.subr.mxu0 0.0
    %393 = vmatpush1.xpose.msra.mxu0 0.0
    %394 = vmatprep.subr.mxu0 0.0
    %395 = vmatpush1.xpose.msra.mxu0 0.0
    %396 = vmatprep.subr.mxu0 0.0
    %397 = vmatpush1.xpose.msra.mxu0 0.0
    %398 = vmatprep.subr.mxu0 0.0
    %399 = vmatpush1.xpose.msra.mxu0 0.0
    %400 = vmatprep.subr.mxu0 0.0
    %401 = vmatpush1.xpose.msra.mxu0 0.0
    %402 = vmatprep.subr.mxu0 0.0
    %403 = vmatpush1.xpose.msra.mxu0 %v372
    %404 = vmatprep.subr.mxu0 0.0
    %405 = vmatpush1.xpose.msra.mxu0 %v369
    %406 = vmatprep.subr.mxu0 0.0
    %407 = vmatpush2.xpose.msra.mxu0 0.0
    %408 = vmatprep.subr.mxu0 0.0
    %409 = vmatpush2.xpose.msra.mxu0 0.0
    %410 = vmatprep.subr.mxu0 0.0
    %411 = vmatpush2.xpose.msra.mxu0 0.0
    %412 = vmatprep.subr.mxu0 0.0
    %413 = vmatpush2.xpose.msra.mxu0 0.0
    %414 = vmatprep.subr.mxu0 0.0
    %415 = vmatpush2.xpose.msra.mxu0 0.0
    %416 = vmatprep.subr.mxu0 0.0
    %417 = vmatpush2.xpose.msra.mxu0 0.0
    %418 = vmatprep.subr.mxu0 0.0
    %419 = vmatpush2.xpose.msra.mxu0 0.0
    %420 = vmatprep.subr.mxu0 0.0
    %421 = vmatpush2.xpose.msra.mxu0 0.0
    %422 = vmatprep.subr.mxu0 0.0
    %423 = vmatpush2.xpose.msra.mxu0 0.0
    %424 = vmatprep.subr.mxu0 0.0
    %425 = vmatpush2.xpose.msra.mxu0 0.0
    %426 = vmatprep.subr.mxu0 0.0
    %427 = vmatpush2.xpose.msra.mxu0 0.0
    %428 = vmatprep.subr.mxu0 0.0
    %429 = vmatpush2.xpose.msra.mxu0 0.0
    %430 = vmatprep.subr.mxu0 0.0
    %431 = vmatpush2.xpose.msra.mxu0 0.0
    %432 = vmatprep.subr.mxu0 0.0
    %433 = vmatpush2.xpose.msra.mxu0 0.0
    %434 = vmatprep.subr.mxu0 0.0
    %435 = vmatpush2.xpose.msra.mxu0 0.0
    %436 = vmatprep.subr.mxu0 0.0
    %437 = vmatpush2.xpose.msra.mxu0 0.0
    %438 = vmatprep.mubr.f32.mxu0 0.0
    %439 = vmatmul.mubr.f32.gmra.mxu0 %v363
    %v440 = vpop.f32.mrf.mxu0
    %v441 = vadd.f32 0.0, %v440
    %v442 = vpop.f32.mrf.mxu0
    %443 = vmatprep.mubr.f32.mxu0 0.0
    %444 = vmatmul.mubr.f32.gmra.mxu0 %v366
    %v445 = vpop.f32.mrf.mxu0
    %v446 = vadd.f32 0.0, %v445
    %v447 = vpop.f32.mrf.mxu0
    %448 = vdwg.mxu0
    %449 = vst.msk [vmem:[#allocation7] sm:$0xff] %vm80, %v354
    %450 = vst.msk [vmem:[#allocation7 + $0x8] sm:$0xff] %vm80, %v359
    %451 = vst.msk [vmem:[#allocation7 + $0x10] sm:$0xff] %vm80, %v441
    %452 = vst.msk [vmem:[#allocation7 + $0x18] sm:$0xff] %vm80, %v446
    // Predicated region
    $region18: #{tpu_custom_call.1} parent=1 // pred_check
      _
    $region19: #{tpu_custom_call.1} parent=1 // pred_check_branch
      %454 = sbr.rel (0) target = $region21
    $region20: #{tpu_custom_call.1} parent=1 // pred_region
      %s456 = ssub.s32 512, 512
      %457 = vsyncadd [#allocation4], %s456
      %s458 = sshll.u32 [#allocation7], 4
      %s459 = int_to_ptr.vmem [resolvable:$true] %s458
      %464 = dma.vmem_to_hbm [thread:$0]  %s459, 512, %s2, [#allocation4], 128, 128, 8
    $region21: #{tpu_custom_call.1} parent=1 // pred_fallthru
      _
    // Predicated region
    $region22: #{tpu_custom_call.1} parent=1 // pred_check
      _
    $region23: #{tpu_custom_call.1} parent=1 // pred_check_branch
      %466 = sbr.rel (0) target = $region25
    $region24: #{tpu_custom_call.1} parent=1 // pred_region
      %467 = dma.done [#allocation4], 512
    $region25: #{tpu_custom_call.1} parent=1 // pred_fallthru
      _
    %468 = vsyncpa [#allocation3], 1
    %469 = vsyncpa [#allocation6], 1
    %470 = vsyncpa [#allocation4], 1

</llo_original>
